<compile_context>
chip_gen: v7x
topology: tpu7x:2x2x1
jax: 0.10.0
libtpu: 0.0.40
codegen_flags: <defaults>
</compile_context>

<pallas_src>
import functools
import math

import jax
import jax.numpy as jnp
from jax import lax
from jax.experimental import pallas as pl
from jax.experimental.pallas import tpu as pltpu


# ---------------------------------------------------------------------------
# Hardware queries (generation-aware tiling / VMEM budgeting).
# ---------------------------------------------------------------------------
def _round_up(x: int, m: int) -> int:
    return ((x + m - 1) // m) * m


def _tpu_generation() -> int:
    try:
        kind = jax.devices()[0].device_kind.lower()
    except Exception:
        return 0
    for g in (7, 6, 5, 4):
        if f"v{g}" in kind:
            return g
    return 0


def _vmem_capacity_bytes(gen: int) -> int:
    try:
        return int(pltpu.get_tpu_info().vmem_capacity_bytes)
    except Exception:
        # v4/v5e/v6e have 128 MiB of VMEM per core, v7x has 64 MiB; unknown ->
        # conservative 64 MiB.
        return (128 if gen in (4, 5, 6) else 64) * 1024 * 1024


# ---------------------------------------------------------------------------
# Kernel.
# ---------------------------------------------------------------------------
def _qkv_attention_kernel(q_ref, k_ref, v_ref, o_ref,
                          qc_ref, m_ref, l_ref, acc_ref,
                          *, half_scale, kv_tile, t_actual, needs_mask,
                          compute_dtype, exp_dtype):
    """One (batch, head-group, q-tile) block; grid axis 3 walks kv tiles.

    q_ref: (1, G, C, tq)   k_ref / v_ref: (1, G, C, tk)   o_ref: (1, G, C, tq)
    Scratch (persists across the kv axis):
      qc_ref  (G, C, tq) compute_dtype -- pre-scaled / pre-cast q
      m_ref   (G, 1, tq) f32           -- running max
      l_ref   (G, 1, tq) f32           -- running sum
      acc_ref (G, C, tq) f32           -- output accumulator
    """
    ki = pl.program_id(3)

    @pl.when(ki == 0)
    def _init():
        m_ref[...] = jnp.full_like(m_ref, -jnp.inf)
        l_ref[...] = jnp.zeros_like(l_ref)
        acc_ref[...] = jnp.zeros_like(acc_ref)
        # Hoisted per-q-tile preprocessing: scale by 1/sqrt(sqrt(ch)) exactly
        # like the reference, cast to the MXU compute dtype once, reuse for
        # every kv step.
        qc_ref[...] = (q_ref[0] * half_scale).astype(compute_dtype)

    q = qc_ref[...]                                           # (G, C, tq)
    k = (k_ref[0] * half_scale).astype(compute_dtype)         # (G, C, tk)

    # s[g, skv, t] = sum_c k[g, c, skv] * q[g, c, t] -> (G, tk, tq); f32 acc.
    s = lax.dot_general(
        k, q,
        dimension_numbers=(((1,), (1,)), ((0,), (0,))),
        preferred_element_type=jnp.float32,
    )

    if needs_mask:
        # Keys beyond the true sequence length are zero-padding: mask them so
        # they get zero softmax weight.
        key_idx = lax.broadcasted_iota(jnp.int32, s.shape, 1) + ki * kv_tile
        s = jnp.where(key_idx < t_actual, s, -1e30)

    # Online softmax over the key axis (sublane axis of s).  m/l/alpha in f32.
    m_prev = m_ref[...]                                       # (G, 1, tq)
    m_new = jnp.maximum(m_prev, jnp.max(s, axis=1, keepdims=True))
    alpha = jnp.exp(m_prev - m_new)                           # (G, 1, tq), f32
    p = jnp.exp((s - m_new).astype(exp_dtype))                # (G, tk, tq)
    l_ref[...] = alpha * l_ref[...] + jnp.sum(
        p.astype(jnp.float32), axis=1, keepdims=True)
    m_ref[...] = m_new

    # pv[g, c, t] = sum_skv v[g, c, skv] * p[g, skv, t] -> (G, C, tq); f32 acc.
    pv = lax.dot_general(
        v_ref[0].astype(compute_dtype), p.astype(compute_dtype),
        dimension_numbers=(((2,), (1,)), ((0,), (0,))),
        preferred_element_type=jnp.float32,
    )
    acc_ref[...] = alpha * acc_ref[...] + pv

    @pl.when(ki == pl.num_programs(3) - 1)
    def _finalize():
        # Exact reciprocal (runs once per q tile -> negligible cost, tighter
        # parity with the PyTorch softmax than approx=True).
        inv_l = pl.reciprocal(l_ref[...], approx=False)       # (G, 1, tq)
        o_ref[0] = (acc_ref[...] * inv_l).astype(o_ref.dtype)


# ---------------------------------------------------------------------------
# Tiling heuristics.
# ---------------------------------------------------------------------------
def _pick_time_tile(t: int, target: int) -> int:
    """Largest multiple of 128 <= target dividing t (t itself if t <= target).

    The wrapper guarantees t is either <= 128 (used as a full dim) or a
    multiple of 128 (zero-padded), so this never returns an awkward tile.
    """
    if t <= target:
        return t
    cand = (target // 128) * 128
    while cand >= 128:
        if t % cand == 0:
            return cand
        cand -= 128
    return 128


def _vmem_estimate(G, ch, tq, tk, in_isz, cmp_isz, exp_isz) -> int:
    chp = _round_up(ch, 8)
    tqp = _round_up(tq, 128)
    tkp = _round_up(tk, 128)
    # Double-buffered q / k / v / out pipeline blocks.
    io = 2 * (G * chp * tqp * in_isz            # q
              + 2 * G * chp * tkp * in_isz      # k, v
              + G * chp * tqp * in_isz)         # out
    # Persistent scratch.
    scratch = (G * chp * tqp * cmp_isz          # cached scaled/cast q
               + G * chp * tqp * 4              # f32 accumulator
               + 2 * G * 8 * tqp * 4)           # running max / sum
    # Per-step temporaries: scores (f32), exp(p), f32 copy for the row sum,
    # cast p for P@V, cast k/v tiles.
    temps = (G * _round_up(tk, 8) * tqp * (4 + exp_isz + 4 + cmp_isz)
             + 2 * G * chp * tkp * cmp_isz)
    return io + scratch + temps


# ---------------------------------------------------------------------------
# Wrapper.
# ---------------------------------------------------------------------------
def qkv_attention(qkv: jax.Array, n_heads: int) -> jax.Array:
    """Pallas equivalent of QKVAttention.forward.

    qkv: [N, 3*H*C, T]  ->  [N, H*C, T]
    """
    bs, width, length = qkv.shape
    assert width % (3 * n_heads) == 0
    ch = width // (3 * n_heads)
    H, T = n_heads, length
    in_dtype = qkv.dtype
    in_isz = jnp.dtype(in_dtype).itemsize

    gen = _tpu_generation()
    vmem_cap = _vmem_capacity_bytes(gen)
    vmem_budget = int(vmem_cap * 0.70)       # target working set
    vmem_limit_cap = int(vmem_cap * 0.85)    # headroom for Mosaic internal scratch

    # bf16 MXU operands everywhere (f32 accumulation); bf16 exp only on v6e/v7x
    # (v5e has no bf16 EUP).
    compute_dtype = jnp.bfloat16
    exp_dtype = jnp.bfloat16 if gen >= 6 else jnp.float32
    cmp_isz = 2
    exp_isz = jnp.dtype(exp_dtype).itemsize

    # --- time padding: keep block last dims at multiples of 128 (or full). ---
    if T > 128 and T % 128 != 0:
        t_pad = _round_up(T, 128)
    else:
        t_pad = T
    needs_mask = t_pad != T

    # v5e/v6e (128 MiB VMEM, lower HBM bw): bigger q tiles cut K/V re-reads;
    # v7x (64 MiB VMEM, 3.2 TB/s HBM): keep the (G,tk,tq) score temp smaller.
    tq_target = 1024 if gen in (4, 5, 6) else 512
    tk_target = 1024
    tq = _pick_time_tile(t_pad, tq_target)
    tk = _pick_time_tile(t_pad, tk_target)

    # --- head-group size: largest divisor of H whose working set fits VMEM. ---
    cands = [g for g in range(H, 0, -1)
             if H % g == 0
             and _vmem_estimate(g, ch, tq, tk, in_isz, cmp_isz, exp_isz)
             <= vmem_budget]
    if not cands:
        cands = [1]
    G = cands[0]
    # v7x has 2 TensorCores per chip: make sure the parallel grid extent >= 2.
    if gen >= 7 and bs * (t_pad // tq) * (H // G) < 2:
        for g in cands:
            if H // g >= 2:
                G = g
                break
    HG = H // G

    est = _vmem_estimate(G, ch, tq, tk, in_isz, cmp_isz, exp_isz)
    vmem_limit = int(min(vmem_limit_cap, max(est * 3 // 2, 32 * 1024 * 1024)))

    # [N, 3*H*C, T] -> [N, 3*H, C, T] is a free (contiguous) reshape; the
    # channel axis now spans the full second-to-last block dim.
    qkv4 = qkv.reshape(bs, 3 * H, ch, T)
    if needs_mask:
        qkv4 = jnp.pad(qkv4, ((0, 0), (0, 0), (0, 0), (0, t_pad - T)))

    grid = (bs, HG, t_pad // tq, t_pad // tk)

    # Three zero-copy views of the SAME qkv buffer: q / k / v head blocks are
    # selected purely by the index_map (no jnp.split, no extra HBM pass).
    q_spec = pl.BlockSpec((1, G, ch, tq), lambda n, g, qi, ki: (n, g, 0, qi))
    k_spec = pl.BlockSpec((1, G, ch, tk), lambda n, g, qi, ki: (n, HG + g, 0, ki))
    v_spec = pl.BlockSpec((1, G, ch, tk), lambda n, g, qi, ki: (n, 2 * HG + g, 0, ki))
    o_spec = pl.BlockSpec((1, G, ch, tq), lambda n, g, qi, ki: (n, g, 0, qi))

    half_scale = 1.0 / math.sqrt(math.sqrt(ch))   # same split as the reference

    kernel = functools.partial(
        _qkv_attention_kernel,
        half_scale=half_scale, kv_tile=tk, t_actual=T, needs_mask=needs_mask,
        compute_dtype=compute_dtype, exp_dtype=exp_dtype,
    )

    out4 = pl.pallas_call(
        kernel,
        out_shape=jax.ShapeDtypeStruct((bs, H, ch, t_pad), in_dtype),
        grid_spec=pltpu.PrefetchScalarGridSpec(
            num_scalar_prefetch=0,
            grid=grid,
            in_specs=[q_spec, k_spec, v_spec],
            out_specs=o_spec,
            scratch_shapes=[
                pltpu.VMEM((G, ch, tq), compute_dtype),   # cached scaled q
                pltpu.VMEM((G, 1, tq), jnp.float32),      # running max
                pltpu.VMEM((G, 1, tq), jnp.float32),      # running sum
                pltpu.VMEM((G, ch, tq), jnp.float32),     # output accumulator
            ],
        ),
        compiler_params=pltpu.CompilerParams(
            dimension_semantics=("parallel", "parallel", "parallel", "arbitrary"),
            vmem_limit_bytes=vmem_limit,
        ),
    )(qkv4, qkv4, qkv4)

    out = out4.reshape(bs, H * ch, t_pad)
    if needs_mask:
        out = out[:, :, :T]
    return out


# ---------------------------------------------------------------------------
# Pure-JAX reference mirroring the PyTorch forward, for validation.
# ---------------------------------------------------------------------------
def _reference(qkv: jax.Array, n_heads: int) -> jax.Array:
    bs, width, length = qkv.shape
    ch = width // (3 * n_heads)
    q, k, v = jnp.split(qkv, 3, axis=1)
    q = q.reshape(bs * n_heads, ch, length)
    k = k.reshape(bs * n_heads, ch, length)
    v = v.reshape(bs * n_heads, ch, length)
    scale = 1.0 / math.sqrt(math.sqrt(ch))
    weight = jnp.einsum("bct,bcs->bts", q * scale, k * scale)
    weight = jax.nn.softmax(weight.astype(jnp.float32), axis=-1).astype(qkv.dtype)
    a = jnp.einsum("bts,bcs->bct", weight, v)
    return a.reshape(bs, -1, length)


if __name__ == "__main__":
    # Module shapes: qkv is [N, 3*H*C, T].  N=2, H=2, C=8, T=16.
    n_heads = 2
    N, C, T = 2, 8, 16
    width = 3 * n_heads * C

    key = jax.random.PRNGKey(0)
    qkv = jax.random.normal(key, (N, width, T), dtype=jnp.float32)

    out = qkv_attention(qkv, n_heads)
    out = jax.block_until_ready(out)

    ref = _reference(qkv, n_heads)
    assert out.shape == (N, n_heads * C, T)
    # bf16 MXU operands (and bf16 exp on v6e/v7x) -> loose-but-realistic tol.
    max_err = float(jnp.max(jnp.abs(out - ref)))
    assert jnp.allclose(out, ref, atol=3e-2, rtol=3e-2), f"max abs err {max_err}"

    print("KERNEL_OK")
</pallas_src>

<mosaic_0001>
module attributes {stable_mosaic.version = 11 : i64} {
  func.func @_qkv_attention_kernel(%arg0: i32, %arg1: i32, %arg2: i32, %arg3: i32, %arg4: memref<1x2x8x16xf32, #tpu.memory_space<vmem>>, %arg5: memref<1x2x8x16xf32, #tpu.memory_space<vmem>>, %arg6: memref<1x2x8x16xf32, #tpu.memory_space<vmem>>, %arg7: memref<1x2x8x16xf32, #tpu.memory_space<vmem>>, %arg8: memref<2x8x16xbf16, #tpu.memory_space<vmem>>, %arg9: memref<2x1x16xf32, #tpu.memory_space<vmem>>, %arg10: memref<2x1x16xf32, #tpu.memory_space<vmem>>, %arg11: memref<2x8x16xf32, #tpu.memory_space<vmem>>) attributes {dimension_semantics = [#tpu.dimension_semantics<parallel>, #tpu.dimension_semantics<parallel>, #tpu.dimension_semantics<parallel>, #tpu.dimension_semantics<arbitrary>], iteration_bounds = array<i64: 2, 1, 1, 1>, scalar_prefetch = 0 : i64, scratch_operands = 4 : i64, tpu.core_type = #tpu.core_type<tc>, window_params = [{transform_indices = @transform_0, window_bounds = array<i64: 1, 2, 8, 16>}, {transform_indices = @transform_1, window_bounds = array<i64: 1, 2, 8, 16>}, {transform_indices = @transform_2, window_bounds = array<i64: 1, 2, 8, 16>}, {transform_indices = @transform_3, window_bounds = array<i64: 1, 2, 8, 16>}]} {
    %c0_i32 = arith.constant 0 : i32
    %0 = arith.cmpi eq, %arg3, %c0_i32 : i32
    %1 = arith.extui %0 : i1 to i32
    %c0_i32_0 = arith.constant 0 : i32
    %2 = arith.cmpi ne, %1, %c0_i32_0 : i32
    scf.if %2 {
      %cst_35 = arith.constant 0xFF800000 : f32
      %39 = vector.broadcast %cst_35 : f32 to vector<2x1x16xf32>
      %c0_36 = arith.constant 0 : index
      %c0_37 = arith.constant 0 : index
      %c0_38 = arith.constant 0 : index
      %40 = vector.load %arg9[%c0_36, %c0_37, %c0_38] : memref<2x1x16xf32, #tpu.memory_space<vmem>>, vector<2x1x16xf32>
      tpu.vector_store %arg9[%c0_36, %c0_37, %c0_38], %39 {strides = array<i32>} : memref<2x1x16xf32, #tpu.memory_space<vmem>>, vector<2x1x16xf32>,
      %cst_39 = arith.constant 0.000000e+00 : f32
      %41 = vector.broadcast %cst_39 : f32 to vector<2x1x16xf32>
      %c0_40 = arith.constant 0 : index
      %c0_41 = arith.constant 0 : index
      %c0_42 = arith.constant 0 : index
      %42 = vector.load %arg10[%c0_40, %c0_41, %c0_42] : memref<2x1x16xf32, #tpu.memory_space<vmem>>, vector<2x1x16xf32>
      tpu.vector_store %arg10[%c0_40, %c0_41, %c0_42], %41 {strides = array<i32>} : memref<2x1x16xf32, #tpu.memory_space<vmem>>, vector<2x1x16xf32>,
      %cst_43 = arith.constant 0.000000e+00 : f32
      %43 = vector.broadcast %cst_43 : f32 to vector<2x8x16xf32>
      %c0_44 = arith.constant 0 : index
      %c0_45 = arith.constant 0 : index
      %c0_46 = arith.constant 0 : index
      %44 = vector.load %arg11[%c0_44, %c0_45, %c0_46] : memref<2x8x16xf32, #tpu.memory_space<vmem>>, vector<2x8x16xf32>
      tpu.vector_store %arg11[%c0_44, %c0_45, %c0_46], %43 {strides = array<i32>} : memref<2x8x16xf32, #tpu.memory_space<vmem>>, vector<2x8x16xf32>,
      %c0_47 = arith.constant 0 : index
      %c0_48 = arith.constant 0 : index
      %c0_49 = arith.constant 0 : index
      %c0_50 = arith.constant 0 : index
      %45 = vector.load %arg4[%c0_47, %c0_48, %c0_49, %c0_50] : memref<1x2x8x16xf32, #tpu.memory_space<vmem>>, vector<1x2x8x16xf32>
      %46 = vector.shape_cast %45 : vector<1x2x8x16xf32> to vector<2x8x16xf32>
      %cst_51 = arith.constant 0.594603539 : f32
      %47 = vector.broadcast %cst_51 : f32 to vector<2x8x16xf32>
      %48 = arith.mulf %46, %47 : vector<2x8x16xf32>
      %49 = arith.truncf %48 : vector<2x8x16xf32> to vector<2x8x16xbf16>
      %c0_52 = arith.constant 0 : index
      %c0_53 = arith.constant 0 : index
      %c0_54 = arith.constant 0 : index
      %50 = vector.load %arg8[%c0_52, %c0_53, %c0_54] : memref<2x8x16xbf16, #tpu.memory_space<vmem>>, vector<2x8x16xbf16>
      tpu.vector_store %arg8[%c0_52, %c0_53, %c0_54], %49 {strides = array<i32>} : memref<2x8x16xbf16, #tpu.memory_space<vmem>>, vector<2x8x16xbf16>,
    } else {
    }
    %c0 = arith.constant 0 : index
    %c0_1 = arith.constant 0 : index
    %c0_2 = arith.constant 0 : index
    %3 = vector.load %arg8[%c0, %c0_1, %c0_2] : memref<2x8x16xbf16, #tpu.memory_space<vmem>>, vector<2x8x16xbf16>
    %c0_3 = arith.constant 0 : index
    %c0_4 = arith.constant 0 : index
    %c0_5 = arith.constant 0 : index
    %c0_6 = arith.constant 0 : index
    %4 = vector.load %arg5[%c0_3, %c0_4, %c0_5, %c0_6] : memref<1x2x8x16xf32, #tpu.memory_space<vmem>>, vector<1x2x8x16xf32>
    %5 = vector.shape_cast %4 : vector<1x2x8x16xf32> to vector<2x8x16xf32>
    %cst = arith.constant 0.594603539 : f32
    %6 = vector.broadcast %cst : f32 to vector<2x8x16xf32>
    %7 = arith.mulf %5, %6 : vector<2x8x16xf32>
    %8 = arith.truncf %7 : vector<2x8x16xf32> to vector<2x8x16xbf16>
    %cst_7 = arith.constant dense<0.000000e+00> : vector<2x16x16xf32>
    %9 = tpu.matmul %8, %3, %cst_7 {dimension_numbers = #tpu.dot_dimension_numbers<[1], [1], [2], [2], [0, 0, 0, 2, 1, 2], [0], [0]>} : vector<2x8x16xbf16>, vector<2x8x16xbf16>, vector<2x16x16xf32> -> vector<2x16x16xf32>
    %c0_8 = arith.constant 0 : index
    %c0_9 = arith.constant 0 : index
    %c0_10 = arith.constant 0 : index
    %10 = vector.load %arg9[%c0_8, %c0_9, %c0_10] : memref<2x1x16xf32, #tpu.memory_space<vmem>>, vector<2x1x16xf32>
    %cst_11 = arith.constant dense<0xFF800000> : vector<2x16xf32>
    %11 = vector.multi_reduction <maximumf>, %9, %cst_11 [1] : vector<2x16x16xf32> to vector<2x16xf32>
    %12 = vector.shape_cast %11 : vector<2x16xf32> to vector<2x1x16xf32>
    %13 = arith.maximumf %10, %12 : vector<2x1x16xf32>
    %14 = arith.subf %10, %13 : vector<2x1x16xf32>
    %15 = math.exp %14 : vector<2x1x16xf32>
    %16 = vector.broadcast %13 : vector<2x1x16xf32> to vector<2x16x16xf32>
    %17 = arith.subf %9, %16 : vector<2x16x16xf32>
    %18 = math.exp %17 : vector<2x16x16xf32>
    %c0_12 = arith.constant 0 : index
    %c0_13 = arith.constant 0 : index
    %c0_14 = arith.constant 0 : index
    %19 = vector.load %arg10[%c0_12, %c0_13, %c0_14] : memref<2x1x16xf32, #tpu.memory_space<vmem>>, vector<2x1x16xf32>
    %20 = arith.mulf %15, %19 : vector<2x1x16xf32>
    %cst_15 = arith.constant dense<0.000000e+00> : vector<2x16xf32>
    %21 = vector.multi_reduction <add>, %18, %cst_15 [1] : vector<2x16x16xf32> to vector<2x16xf32>
    %22 = vector.shape_cast %21 : vector<2x16xf32> to vector<2x1x16xf32>
    %23 = arith.addf %20, %22 : vector<2x1x16xf32>
    %c0_16 = arith.constant 0 : index
    %c0_17 = arith.constant 0 : index
    %c0_18 = arith.constant 0 : index
    %24 = vector.load %arg10[%c0_16, %c0_17, %c0_18] : memref<2x1x16xf32, #tpu.memory_space<vmem>>, vector<2x1x16xf32>
    tpu.vector_store %arg10[%c0_16, %c0_17, %c0_18], %23 {strides = array<i32>} : memref<2x1x16xf32, #tpu.memory_space<vmem>>, vector<2x1x16xf32>,
    %c0_19 = arith.constant 0 : index
    %c0_20 = arith.constant 0 : index
    %c0_21 = arith.constant 0 : index
    %25 = vector.load %arg9[%c0_19, %c0_20, %c0_21] : memref<2x1x16xf32, #tpu.memory_space<vmem>>, vector<2x1x16xf32>
    tpu.vector_store %arg9[%c0_19, %c0_20, %c0_21], %13 {strides = array<i32>} : memref<2x1x16xf32, #tpu.memory_space<vmem>>, vector<2x1x16xf32>,
    %c0_22 = arith.constant 0 : index
    %c0_23 = arith.constant 0 : index
    %c0_24 = arith.constant 0 : index
    %c0_25 = arith.constant 0 : index
    %26 = vector.load %arg6[%c0_22, %c0_23, %c0_24, %c0_25] : memref<1x2x8x16xf32, #tpu.memory_space<vmem>>, vector<1x2x8x16xf32>
    %27 = vector.shape_cast %26 : vector<1x2x8x16xf32> to vector<2x8x16xf32>
    %28 = arith.truncf %27 : vector<2x8x16xf32> to vector<2x8x16xbf16>
    %29 = arith.truncf %18 : vector<2x16x16xf32> to vector<2x16x16xbf16>
    %cst_26 = arith.constant dense<0.000000e+00> : vector<2x8x16xf32>
    %30 = tpu.matmul %28, %29, %cst_26 {dimension_numbers = #tpu.dot_dimension_numbers<[2], [1], [1], [2], [0, 0, 0, 1, 1, 2], [0], [0]>} : vector<2x8x16xbf16>, vector<2x16x16xbf16>, vector<2x8x16xf32> -> vector<2x8x16xf32>
    %c0_27 = arith.constant 0 : index
    %c0_28 = arith.constant 0 : index
    %c0_29 = arith.constant 0 : index
    %31 = vector.load %arg11[%c0_27, %c0_28, %c0_29] : memref<2x8x16xf32, #tpu.memory_space<vmem>>, vector<2x8x16xf32>
    %32 = vector.broadcast %15 : vector<2x1x16xf32> to vector<2x8x16xf32>
    %33 = arith.mulf %32, %31 : vector<2x8x16xf32>
    %34 = arith.addf %33, %30 : vector<2x8x16xf32>
    %c0_30 = arith.constant 0 : index
    %c0_31 = arith.constant 0 : index
    %c0_32 = arith.constant 0 : index
    %35 = vector.load %arg11[%c0_30, %c0_31, %c0_32] : memref<2x8x16xf32, #tpu.memory_space<vmem>>, vector<2x8x16xf32>
    tpu.vector_store %arg11[%c0_30, %c0_31, %c0_32], %34 {strides = array<i32>} : memref<2x8x16xf32, #tpu.memory_space<vmem>>, vector<2x8x16xf32>,
    %c0_i32_33 = arith.constant 0 : i32
    %36 = arith.cmpi eq, %arg3, %c0_i32_33 : i32
    %37 = arith.extui %36 : i1 to i32
    %c0_i32_34 = arith.constant 0 : i32
    %38 = arith.cmpi ne, %37, %c0_i32_34 : i32
    scf.if %38 {
      %c0_35 = arith.constant 0 : index
      %c0_36 = arith.constant 0 : index
      %c0_37 = arith.constant 0 : index
      %39 = vector.load %arg10[%c0_35, %c0_36, %c0_37] : memref<2x1x16xf32, #tpu.memory_space<vmem>>, vector<2x1x16xf32>
      %40 = tpu.reciprocal %39 : vector<2x1x16xf32> -> vector<2x1x16xf32>
      %c0_38 = arith.constant 0 : index
      %c0_39 = arith.constant 0 : index
      %c0_40 = arith.constant 0 : index
      %41 = vector.load %arg11[%c0_38, %c0_39, %c0_40] : memref<2x8x16xf32, #tpu.memory_space<vmem>>, vector<2x8x16xf32>
      %42 = vector.broadcast %40 : vector<2x1x16xf32> to vector<2x8x16xf32>
      %43 = arith.mulf %41, %42 : vector<2x8x16xf32>
      %c0_41 = arith.constant 0 : index
      %c0_42 = arith.constant 0 : index
      %c0_43 = arith.constant 0 : index
      %c0_44 = arith.constant 0 : index
      %44 = vector.load %arg7[%c0_41, %c0_42, %c0_43, %c0_44] : memref<1x2x8x16xf32, #tpu.memory_space<vmem>>, vector<1x2x8x16xf32>
      %45 = vector.shape_cast %44 : vector<1x2x8x16xf32> to vector<2x8x16xf32>
      %46 = vector.shape_cast %43 : vector<2x8x16xf32> to vector<1x2x8x16xf32>
      tpu.vector_store %arg7[%c0_41, %c0_42, %c0_43, %c0_44], %46 {strides = array<i32>} : memref<1x2x8x16xf32, #tpu.memory_space<vmem>>, vector<1x2x8x16xf32>,
    } else {
    }
    return
  }
  func.func @transform_0(%arg0: i32, %arg1: i32, %arg2: i32, %arg3: i32) -> (i32, i32, i32, i32) {
    %c0_i32 = arith.constant 0 : i32
    %c0_i32_0 = arith.constant 0 : i32
    return %arg0, %arg1, %c0_i32, %arg2 : i32, i32, i32, i32
  }
  func.func @transform_1(%arg0: i32, %arg1: i32, %arg2: i32, %arg3: i32) -> (i32, i32, i32, i32) {
    %c1_i32 = arith.constant 1 : i32
    %0 = arith.addi %c1_i32, %arg1 : i32
    %c0_i32 = arith.constant 0 : i32
    %c0_i32_0 = arith.constant 0 : i32
    return %arg0, %0, %c0_i32, %arg3 : i32, i32, i32, i32
  }
  func.func @transform_2(%arg0: i32, %arg1: i32, %arg2: i32, %arg3: i32) -> (i32, i32, i32, i32) {
    %c2_i32 = arith.constant 2 : i32
    %0 = arith.addi %c2_i32, %arg1 : i32
    %c0_i32 = arith.constant 0 : i32
    %c0_i32_0 = arith.constant 0 : i32
    return %arg0, %0, %c0_i32, %arg3 : i32, i32, i32, i32
  }
  func.func @transform_3(%arg0: i32, %arg1: i32, %arg2: i32, %arg3: i32) -> (i32, i32, i32, i32) {
    %c0_i32 = arith.constant 0 : i32
    %c0_i32_0 = arith.constant 0 : i32
    return %arg0, %arg1, %c0_i32, %arg2 : i32, i32, i32, i32
  }
}

</mosaic_0001>

<llo_original>
// kernel: tpu_custom_call.1
$region0: #{tpu_custom_call.1}
  #allocation0 [shape = 'u32[]', space=smem, size = 0x4, offset = 0x4, fixed_abs, tag = 'smem constant byte address 0x4 - core index']
  #allocation1 [shape = 'u32[144,128]{1,0:T(1,128)}', space=vmem, size = 0x12000, scoped, tag = 'internal scratch']
  #allocation2 [shape = 'bf16[2,8,16]{2,1,0:T(8,128)(2,1)}', space=vmem, size = 0x1000, scoped, tag = 'scratch operand']
  #allocation3 [shape = 'f32[2,1,16]{2,1,0:T(1,128)}', space=vmem, size = 0x400, scoped, tag = 'scratch operand']
  #allocation4 [shape = 'f32[2,1,16]{2,1,0:T(1,128)}', space=vmem, size = 0x400, scoped, tag = 'scratch operand']
  #allocation5 [shape = 'f32[2,8,16]{2,1,0:T(8,128)}', space=vmem, size = 0x2000, scoped, tag = 'scratch operand']
  %s0 = inlined_call_operand.hbm [shape: f32[2,6,8,16], index: 0, kind: input, shape index: {}]
  %s1 = inlined_call_operand.hbm [shape: f32[2,6,8,16], index: 1, kind: input, shape index: {}]
  %s2 = inlined_call_operand.hbm [shape: f32[2,6,8,16], index: 2, kind: input, shape index: {}]
  %s3 = inlined_call_operand.hbm [shape: f32[2,2,8,16], index: 3, kind: output, shape index: {}]
  %s4 = sld [smem:[#allocation0]]
  $region65: #{tpu_custom_call.1} parent=0
    _
  %s6 = ssub.s32 1, %s4
  %s7 = scalar_select 0, %s6, %s4
  $region1: #{tpu_custom_call.1} parent=0
    #allocation6 [shape = 'u8[16384]{0}', space=vmem, size = 0x4000, scoped, tag = 'input window, operand 0']
    #allocation7 [shape = 's32[2]{0}', space=sflag, size = 0x8, scoped, tag = 'scoped memory for tpu_custom_call.1']
    #allocation8 [shape = 's32[2]{0}', space=sflag, size = 0x8, scoped, tag = 'scoped memory for tpu_custom_call.1']
    #allocation9 [shape = 'u8[16384]{0}', space=vmem, size = 0x4000, scoped, tag = 'input window, operand 1']
    #allocation10 [shape = 's32[2]{0}', space=sflag, size = 0x8, scoped, tag = 'scoped memory for tpu_custom_call.1']
    #allocation11 [shape = 'u8[16384]{0}', space=vmem, size = 0x4000, scoped, tag = 'input window, operand 2']
    #allocation12 [shape = 'u8[16384]{0}', space=vmem, size = 0x4000, scoped, tag = 'output window, operand 0']
    %8 = vsyncpa [#allocation7], 0
    %s9 = scalar_lea.sflag [#allocation7], 1
    %10 = vsyncpa %s9, 0
    %11 = vsyncpa [#allocation10], 0
    %s12 = scalar_lea.sflag [#allocation10], 1
    %13 = vsyncpa %s12, 0
    %14 = vsyncpa [#allocation8], 0
    %s15 = scalar_lea.sflag [#allocation8], 1
    %16 = vsyncpa %s15, 0
    loop: start=0, step=1, limit=4
    $region2: #{tpu_custom_call.1} parent=1 // loop_pre_header
      _
    $region3: #{tpu_custom_call.1} parent=1 // loop_header
      %s18 = sphi 0, %s22
      %p19 = scmp.ge.s32.totalorder %s18, 4
      %s25 = sphi 0, %s51
      %s26 = sphi 0, %s47
      %s27 = sphi 0, %s43
      %s28 = sphi 0, %s39
      %s29 = sphi 0, %s25
      %s30 = sphi 0, %s26
      %s31 = sphi 0, %s27
      %s32 = sphi 0, %s28
      %s33 = sphi 0, %s29
      %s34 = sphi 0, %s30
      %s35 = sphi 0, %s31
      %s36 = sphi 0, %s32
      %s58 = sphi 0, %s60
      %s61 = sphi 0, %s58
      %s62 = sphi 0, %s61
      %s78 = sphi 0, %s62
      %s90 = sphi 0, %s92
      %s93 = sphi 0, %s90
      %s94 = sphi 0, %s93
      %s110 = sphi 0, %s94
      %s122 = sphi 0, %s124
      %s125 = sphi 0, %s122
      %s126 = sphi 0, %s125
      %s142 = sphi 0, %s126
      %s152 = sphi 0, %s154
      %s155 = sphi 0, %s152
      %s156 = sphi 0, %s155
      %s172 = sphi 0, %s156
    $region4: #{tpu_custom_call.1} parent=1 // loop_header_branch
      %21 = sbr.rel (%p19) target = $region8
    $region5: #{tpu_custom_call.1} parent=1 // loop_body
      %s23 = ssub.s32 %s18, 1
      %s24 = ssub.s32 %s18, 2
      %s37 = sadd.s32 1, %s28
      %p38 = scmp.ge.s32.totalorder %s37, 1
      %s39 = scalar_select %p38, 0, %s37
      %s40 = sadd.s32 1, %s27
      %s41 = scalar_select %p38, %s40, %s27
      %p42 = scmp.ge.s32.totalorder %s41, 1
      %s43 = scalar_select %p42, 0, %s41
      %s44 = sadd.s32 1, %s26
      %s45 = scalar_select %p42, %s44, %s26
      %p46 = scmp.ge.s32.totalorder %s45, 1
      %s47 = scalar_select %p46, 0, %s45
      %s48 = sadd.s32 1, %s25
      %s49 = scalar_select %p46, %s48, %s25
      %p50 = scmp.ge.s32.totalorder %s49, 2
      %s51 = scalar_select %p50, 0, %s49
      %s52 = ssub.s32 %s25, %s51
      %s53 = ssub.s32 %s26, %s47
      %s54 = sor.u32 %s52, %s53
      %s55 = ssub.s32 %s27, %s43
      %s56 = sor.u32 %s54, %s55
      %p57 = scmp.eq.s32.totalorder %s56, 0
      %s59 = sadd.s32 %s58, 1
      %s60 = scalar_select %p57, %s58, %s59
      %p63 = pneg %p57
      %p64 = scmp.eq.s32.totalorder %s18, 1
      %p65 = por %p63, %p64
      %p66 = scmp.ne.s32.totalorder %s58, %s61
      %p67 = scmp.eq.s32.totalorder %s18, 0
      %p68 = por %p66, %p67
      %p69 = scmp.ne.s32.totalorder %s58, %s61
      %p70 = scmp.eq.s32.totalorder %s23, 1
      %p71 = por %p69, %p70
      %p72 = scmp.ne.s32.totalorder %s61, %s62
      %p73 = scmp.eq.s32.totalorder %s23, 0
      %p74 = por %p72, %p73
      %p75 = scmp.ne.s32.totalorder %s61, %s62
      %p76 = scmp.eq.s32.totalorder %s24, 1
      %p77 = por %p75, %p76
      %p79 = scmp.ne.s32.totalorder %s62, %s78
      %p80 = scmp.eq.s32.totalorder %s24, 0
      %p81 = por %p79, %p80
      %s82 = sadd.s32 %s26, 1
      %s83 = sadd.s32 %s47, 1
      %s84 = ssub.s32 %s25, %s51
      %s85 = ssub.s32 %s82, %s83
      %s86 = sor.u32 %s84, %s85
      %s87 = ssub.s32 %s28, %s39
      %s88 = sor.u32 %s86, %s87
      %p89 = scmp.eq.s32.totalorder %s88, 0
      %s91 = sadd.s32 %s90, 1
      %s92 = scalar_select %p89, %s90, %s91
      %p95 = pneg %p89
      %p96 = scmp.eq.s32.totalorder %s18, 1
      %p97 = por %p95, %p96
      %p98 = scmp.ne.s32.totalorder %s90, %s93
      %p99 = scmp.eq.s32.totalorder %s18, 0
      %p100 = por %p98, %p99
      %p101 = scmp.ne.s32.totalorder %s90, %s93
      %p102 = scmp.eq.s32.totalorder %s23, 1
      %p103 = por %p101, %p102
      %p104 = scmp.ne.s32.totalorder %s93, %s94
      %p105 = scmp.eq.s32.totalorder %s23, 0
      %p106 = por %p104, %p105
      %p107 = scmp.ne.s32.totalorder %s93, %s94
      %p108 = scmp.eq.s32.totalorder %s24, 1
      %p109 = por %p107, %p108
      %p111 = scmp.ne.s32.totalorder %s94, %s110
      %p112 = scmp.eq.s32.totalorder %s24, 0
      %p113 = por %p111, %p112
      %s114 = sadd.s32 %s26, 2
      %s115 = sadd.s32 %s47, 2
      %s116 = ssub.s32 %s25, %s51
      %s117 = ssub.s32 %s114, %s115
      %s118 = sor.u32 %s116, %s117
      %s119 = ssub.s32 %s28, %s39
      %s120 = sor.u32 %s118, %s119
      %p121 = scmp.eq.s32.totalorder %s120, 0
      %s123 = sadd.s32 %s122, 1
      %s124 = scalar_select %p121, %s122, %s123
      %p127 = pneg %p121
      %p128 = scmp.eq.s32.totalorder %s18, 1
      %p129 = por %p127, %p128
      %p130 = scmp.ne.s32.totalorder %s122, %s125
      %p131 = scmp.eq.s32.totalorder %s18, 0
      %p132 = por %p130, %p131
      %p133 = scmp.ne.s32.totalorder %s122, %s125
      %p134 = scmp.eq.s32.totalorder %s23, 1
      %p135 = por %p133, %p134
      %p136 = scmp.ne.s32.totalorder %s125, %s126
      %p137 = scmp.eq.s32.totalorder %s23, 0
      %p138 = por %p136, %p137
      %p139 = scmp.ne.s32.totalorder %s125, %s126
      %p140 = scmp.eq.s32.totalorder %s24, 1
      %p141 = por %p139, %p140
      %p143 = scmp.ne.s32.totalorder %s126, %s142
      %p144 = scmp.eq.s32.totalorder %s24, 0
      %p145 = por %p143, %p144
      %s146 = ssub.s32 %s25, %s51
      %s147 = ssub.s32 %s26, %s47
      %s148 = sor.u32 %s146, %s147
      %s149 = ssub.s32 %s27, %s43
      %s150 = sor.u32 %s148, %s149
      %p151 = scmp.eq.s32.totalorder %s150, 0
      %s153 = sadd.s32 %s152, 1
      %s154 = scalar_select %p151, %s152, %s153
      %p157 = pneg %p151
      %p158 = scmp.eq.s32.totalorder %s18, 1
      %p159 = por %p157, %p158
      %p160 = scmp.ne.s32.totalorder %s152, %s155
      %p161 = scmp.eq.s32.totalorder %s18, 0
      %p162 = por %p160, %p161
      %p163 = scmp.ne.s32.totalorder %s152, %s155
      %p164 = scmp.eq.s32.totalorder %s23, 1
      %p165 = por %p163, %p164
      %p166 = scmp.ne.s32.totalorder %s155, %s156
      %p167 = scmp.eq.s32.totalorder %s23, 0
      %p168 = por %p166, %p167
      %p169 = scmp.ne.s32.totalorder %s155, %s156
      %p170 = scmp.eq.s32.totalorder %s24, 1
      %p171 = por %p169, %p170
      %p173 = scmp.ne.s32.totalorder %s156, %s172
      %p174 = scmp.eq.s32.totalorder %s24, 0
      %p175 = por %p173, %p174
      %p176 = scmp.le.s32.totalorder 1, %s18
      %p177 = scmp.lt.s32.totalorder %s18, 3
      %p178 = pnand %p176, %p177
      %p179 = pneg %p178
      // Predicated region
      $region9: #{tpu_custom_call.1} parent=5 // pred_check
        _
      $region10: #{tpu_custom_call.1} parent=5 // pred_check_branch
        %181 = sbr.rel (%p178) target = $region12
      $region11: #{tpu_custom_call.1} parent=5 // pred_region
        %s182 = ssub.s32 %s18, 1
      $region12: #{tpu_custom_call.1} parent=5 // pred_fallthru
        _
      %p183 = scmp.lt.s32.totalorder %s18, 2
      // Predicated region
      $region13: #{tpu_custom_call.1} parent=5 // pred_check
        %p184 = pneg %p183
      $region14: #{tpu_custom_call.1} parent=5 // pred_check_branch
        %186 = sbr.rel (%p184) target = $region16
      $region15: #{tpu_custom_call.1} parent=5 // pred_region
        // Predicated region
        $region17: #{tpu_custom_call.1} parent=15 // pred_check
          %p187 = pneg %p68
        $region18: #{tpu_custom_call.1} parent=15 // pred_check_branch
          %189 = sbr.rel (%p187) target = $region20
        $region19: #{tpu_custom_call.1} parent=15 // pred_region
          %s190 = sand.u32 %s58, 1
          %s191 = scalar_lea.sflag [#allocation7], %s190
          %s192 = sand.u32 %s58, 1
          %s193 = smul.addr %s192, 16
          %s194 = scalar_lea.vmem [#allocation6], %s193
          %s195 = smul.u32 2, %s26
          %s197 = ssub.s32 256, 256
          %198 = vsyncadd %s191, %s197
          %s199 = sadd.s32 %s27, %s195
          %s200 = smul.addr %s25, 6
          %s201 = sadd.s32 %s199, %s200
          %s202 = smul.addr %s201, 128
          %s203 = scalar_lea.hbm %s0, %s202
          %s204 = sshll.u32 %s194, 4
          %s205 = int_to_ptr.vmem [resolvable:$true] %s204
          %210 = dma.hbm_to_vmem [thread:$0]  %s203, 256, %s205, %s191, 128, 128, 8
        $region20: #{tpu_custom_call.1} parent=15 // pred_fallthru
          _
        // Predicated region
        $region21: #{tpu_custom_call.1} parent=15 // pred_check
          %p211 = pneg %p100
        $region22: #{tpu_custom_call.1} parent=15 // pred_check_branch
          %213 = sbr.rel (%p211) target = $region24
        $region23: #{tpu_custom_call.1} parent=15 // pred_region
          %s214 = sand.u32 %s18, 1
          %s215 = scalar_lea.sflag [#allocation10], %s214
          %s216 = sand.u32 %s90, 1
          %s217 = smul.addr %s216, 16
          %s218 = scalar_lea.vmem [#allocation9], %s217
          %s219 = sadd.s32 %s26, 1
          %s220 = smul.u32 2, %s219
          %s222 = ssub.s32 256, 256
          %223 = vsyncadd %s215, %s222
          %s224 = sadd.s32 %s28, %s220
          %s225 = smul.addr %s25, 6
          %s226 = sadd.s32 %s224, %s225
          %s227 = smul.addr %s226, 128
          %s228 = scalar_lea.hbm %s1, %s227
          %s229 = sshll.u32 %s218, 4
          %s230 = int_to_ptr.vmem [resolvable:$true] %s229
          %235 = dma.hbm_to_vmem [thread:$0]  %s228, 256, %s230, %s215, 128, 128, 8
        $region24: #{tpu_custom_call.1} parent=15 // pred_fallthru
          _
        // Predicated region
        $region25: #{tpu_custom_call.1} parent=15 // pred_check
          %p236 = pneg %p132
        $region26: #{tpu_custom_call.1} parent=15 // pred_check_branch
          %238 = sbr.rel (%p236) target = $region28
        $region27: #{tpu_custom_call.1} parent=15 // pred_region
          %s239 = sand.u32 %s18, 1
          %s240 = scalar_lea.sflag [#allocation10], %s239
          %s241 = sand.u32 %s122, 1
          %s242 = smul.addr %s241, 16
          %s243 = scalar_lea.vmem [#allocation11], %s242
          %s244 = sadd.s32 %s26, 2
          %s245 = smul.u32 2, %s244
          %s247 = ssub.s32 256, 256
          %248 = vsyncadd %s240, %s247
          %s249 = sadd.s32 %s28, %s245
          %s250 = smul.addr %s25, 6
          %s251 = sadd.s32 %s249, %s250
          %s252 = smul.addr %s251, 128
          %s253 = scalar_lea.hbm %s2, %s252
          %s254 = sshll.u32 %s243, 4
          %s255 = int_to_ptr.vmem [resolvable:$true] %s254
          %260 = dma.hbm_to_vmem [thread:$0]  %s253, 256, %s255, %s240, 128, 128, 8
        $region28: #{tpu_custom_call.1} parent=15 // pred_fallthru
          _
      $region16: #{tpu_custom_call.1} parent=5 // pred_fallthru
        _
      %p261 = scmp.le.s32.totalorder 1, %s18
      %p262 = scmp.lt.s32.totalorder %s18, 3
      %p263 = pnand %p261, %p262
      %p264 = pneg %p263
      // Predicated region
      $region29: #{tpu_custom_call.1} parent=5 // pred_check
        _
      $region30: #{tpu_custom_call.1} parent=5 // pred_check_branch
        %266 = sbr.rel (%p263) target = $region32
      $region31: #{tpu_custom_call.1} parent=5 // pred_region
        %s267 = ssub.s32 %s18, 1
        %s268 = sand.u32 %s61, 1
        %s269 = scalar_lea.sflag [#allocation7], %s268
        %s270 = sand.u32 %s61, 1
        %s271 = smul.addr %s270, 16
        %s272 = scalar_lea.vmem [#allocation6], %s271
        // Predicated region
        $region33: #{tpu_custom_call.1} parent=31 // pred_check
          %p273 = pneg %p74
        $region34: #{tpu_custom_call.1} parent=31 // pred_check_branch
          %275 = sbr.rel (%p273) target = $region36
        $region35: #{tpu_custom_call.1} parent=31 // pred_region
          %276 = dma.done %s269, 256
        $region36: #{tpu_custom_call.1} parent=31 // pred_fallthru
          _
        %s277 = sand.u32 %s23, 1
        %s278 = scalar_lea.sflag [#allocation10], %s277
        %s279 = sand.u32 %s93, 1
        %s280 = smul.addr %s279, 16
        %s281 = scalar_lea.vmem [#allocation9], %s280
        // Predicated region
        $region37: #{tpu_custom_call.1} parent=31 // pred_check
          %p282 = pneg %p106
        $region38: #{tpu_custom_call.1} parent=31 // pred_check_branch
          %284 = sbr.rel (%p282) target = $region40
        $region39: #{tpu_custom_call.1} parent=31 // pred_region
          %285 = dma.done %s278, 256
        $region40: #{tpu_custom_call.1} parent=31 // pred_fallthru
          _
        %s286 = sand.u32 %s23, 1
        %s287 = scalar_lea.sflag [#allocation10], %s286
        %s288 = sand.u32 %s125, 1
        %s289 = smul.addr %s288, 16
        %s290 = scalar_lea.vmem [#allocation11], %s289
        // Predicated region
        $region41: #{tpu_custom_call.1} parent=31 // pred_check
          %p291 = pneg %p138
        $region42: #{tpu_custom_call.1} parent=31 // pred_check_branch
          %293 = sbr.rel (%p291) target = $region44
        $region43: #{tpu_custom_call.1} parent=31 // pred_region
          %294 = dma.done %s287, 256
        $region44: #{tpu_custom_call.1} parent=31 // pred_fallthru
          _
        %s295 = sand.u32 %s61, 1
        %s296 = scalar_lea.sflag [#allocation7], %s295
        %s297 = sand.u32 %s61, 1
        %s298 = smul.addr %s297, 16
        %s299 = scalar_lea.vmem [#allocation6], %s298
        %p300 = pneg %p74
        %p301 = pneg %p71
        %s302 = sand.u32 %s23, 1
        %s303 = scalar_lea.sflag [#allocation10], %s302
        %s304 = sand.u32 %s93, 1
        %s305 = smul.addr %s304, 16
        %s306 = scalar_lea.vmem [#allocation9], %s305
        %p307 = pneg %p106
        %p308 = pneg %p103
        %s309 = sand.u32 %s23, 1
        %s310 = scalar_lea.sflag [#allocation10], %s309
        %s311 = sand.u32 %s125, 1
        %s312 = smul.addr %s311, 16
        %s313 = scalar_lea.vmem [#allocation11], %s312
        %p314 = pneg %p138
        %p315 = pneg %p135
        %p316 = pneg %p168
        %p317 = pneg %p165
        %s318 = sand.u32 %s155, 1
        %s319 = scalar_lea.sflag [#allocation8], %s318
        %s320 = sand.u32 %s155, 1
        %s321 = smul.addr %s320, 16
        %s322 = scalar_lea.vmem [#allocation12], %s321
        %s323 = smul.u32 2, %s30
        %s324 = sadd.s32 %s30, 1
        %s325 = smul.u32 2, %s324
        %s326 = sadd.s32 %s30, 2
        %s327 = smul.u32 2, %s326
        %s328 = smul.u32 2, %s30
        %p330 = scmp.eq.s32.totalorder %s32, 0
        // Predicated region
        $region45: #{tpu_custom_call.1} parent=31 // pred_check
          %p331 = pneg %p330
        $region46: #{tpu_custom_call.1} parent=31 // pred_check_branch
          %333 = sbr.rel (%p331) target = $region48
        $region47: #{tpu_custom_call.1} parent=31 // pred_region
          %vm334 = vcmask 122880
          %335 = vst.msk [vmem:[#allocation3] sm:$0x1] %vm334, -inf
          %336 = vst.msk [vmem:[#allocation3 + $0x1] sm:$0x1] %vm334, -inf
          %337 = vst.msk [vmem:[#allocation4] sm:$0x1] %vm334, 0.0
          %338 = vst.msk [vmem:[#allocation4 + $0x1] sm:$0x1] %vm334, 0.0
          %vm339 = vcmask 130048
          %340 = vst.msk [vmem:[#allocation5] sm:$0xff] %vm339, 0.0
          %341 = vst.msk [vmem:[#allocation5 + $0x8] sm:$0xff] %vm339, 0.0
          %v342 = vld [vmem:[%s272] sm:$0xff]
          %v343 = vld [vmem:[%s272 + $0x8] sm:$0xff]
          %v344 = vmul.f32 %v342, 0.59460354
          %v345 = vmul.f32 %v343, 0.59460354
          %v346 = vpack.c.bf16 %v344, %v344
          %v347 = vpack.c.bf16 %v345, %v345
          %vm348 = vcmask 125952
          %349 = vst.msk [vmem:[#allocation2] sm:$0xf] %vm348, %v346
          %350 = vst.msk [vmem:[#allocation2 + $0x4] sm:$0xf] %vm348, %v347
        $region48: #{tpu_custom_call.1} parent=31 // pred_fallthru
          _
        %v351 = vld [vmem:[#allocation2] sm:$0xf]
        %v352 = vld [vmem:[#allocation2 + $0x4] sm:$0xf]
        %v353 = vld [vmem:[%s281] sm:$0xff]
        %v354 = vld [vmem:[%s281 + $0x8] sm:$0xff]
        %v355 = vmul.f32 %v353, 0.59460354
        %v356 = vmul.f32 %v354, 0.59460354
        %v357 = vpack.c.bf16 %v355, %v355
        %v358 = vpack.c.bf16 %v356, %v356
        %359 = vxpose.xlu0.c.b16.start [1/8] %v357, 128
        %360 = vxpose.xlu0.c.b16.cont [2/8] 0, 128
        %361 = vxpose.xlu0.c.b16.cont [3/8] 0, 128
        %362 = vxpose.xlu0.c.b16.cont [4/8] 0, 128
        %363 = vxpose.xlu0.c.b16.cont [5/8] 0, 128
        %364 = vxpose.xlu0.c.b16.cont [6/8] 0, 128
        %365 = vxpose.xlu0.c.b16.cont [7/8] 0, 128
        %366 = vxpose.xlu0.c.b16.end [8/8] 0, 128
        %v367 = vpop.trf.xlu0
        %v368 = vpop.trf.xlu0
        %v369 = vpop.trf.xlu0
        %v370 = vpop.trf.xlu0
        %v371 = vpop.trf.xlu0
        %v372 = vpop.trf.xlu0
        %v373 = vpop.trf.xlu0
        %v374 = vpop.trf.xlu0
        %vm375 = vcmask 64512
        %v377 = vsel %vm375, %v367, 0
        %vm379 = vcmask 1043456
        %v381 = vsel %vm379, %v351, 0
        %383 = vmatprep.subr.bf16.mxu0 0
        %384 = vmatpush1.bf16.msra.mxu0 %v381
        %385 = vmatprep.subr.bf16.mxu0 0
        %386 = vmatpush1.bf16.msra.mxu0 0
        %387 = vmatprep.subr.bf16.mxu0 0
        %388 = vmatpush1.bf16.msra.mxu0 0
        %389 = vmatprep.subr.bf16.mxu0 0
        %390 = vmatpush1.bf16.msra.mxu0 0
        %391 = vmatprep.subr.bf16.mxu0 0
        %392 = vmatpush1.bf16.msra.mxu0 0
        %393 = vmatprep.subr.bf16.mxu0 0
        %394 = vmatpush1.bf16.msra.mxu0 0
        %395 = vmatprep.subr.bf16.mxu0 0
        %396 = vmatpush1.bf16.msra.mxu0 0
        %397 = vmatprep.subr.bf16.mxu0 0
        %398 = vmatpush1.bf16.msra.mxu0 0
        %399 = vmatprep.subr.bf16.mxu0 0
        %400 = vmatpush1.bf16.msra.mxu0 0
        %401 = vmatprep.subr.bf16.mxu0 0
        %402 = vmatpush1.bf16.msra.mxu0 0
        %403 = vmatprep.subr.bf16.mxu0 0
        %404 = vmatpush1.bf16.msra.mxu0 0
        %405 = vmatprep.subr.bf16.mxu0 0
        %406 = vmatpush1.bf16.msra.mxu0 0
        %407 = vmatprep.subr.bf16.mxu0 0
        %408 = vmatpush1.bf16.msra.mxu0 0
        %409 = vmatprep.subr.bf16.mxu0 0
        %410 = vmatpush1.bf16.msra.mxu0 0
        %411 = vmatprep.subr.bf16.mxu0 0
        %412 = vmatpush1.bf16.msra.mxu0 0
        %413 = vmatprep.subr.bf16.mxu0 0
        %414 = vmatpush1.bf16.msra.mxu0 0
        %415 = vmatprep.mubr.bf16.mxu0 0
        %416 = vmatmul.mubr.bf16.gmra.mrb[0].mxu0 %v377
        %v417 = vpop.f32.mrb[0].mxu0
        %v418 = vadd.f32 0.0, %v417
        %v419 = vpop.f32.mrb[0].mxu0
        %v420 = vpop.f32.mrb[0].mxu0
        %v421 = vadd.f32 0.0, %v420
        %v422 = vpop.f32.mrb[0].mxu0
        %423 = vdwg.mxu0
        %424 = vxpose.xlu0.c.b16.start [1/8] %v358, 128
        %425 = vxpose.xlu0.c.b16.cont [2/8] 0, 128
        %426 = vxpose.xlu0.c.b16.cont [3/8] 0, 128
        %427 = vxpose.xlu0.c.b16.cont [4/8] 0, 128
        %428 = vxpose.xlu0.c.b16.cont [5/8] 0, 128
        %429 = vxpose.xlu0.c.b16.cont [6/8] 0, 128
        %430 = vxpose.xlu0.c.b16.cont [7/8] 0, 128
        %431 = vxpose.xlu0.c.b16.end [8/8] 0, 128
        %v432 = vpop.trf.xlu0
        %v433 = vpop.trf.xlu0
        %v434 = vpop.trf.xlu0
        %v435 = vpop.trf.xlu0
        %v436 = vpop.trf.xlu0
        %v437 = vpop.trf.xlu0
        %v438 = vpop.trf.xlu0
        %v439 = vpop.trf.xlu0
        %v441 = vsel %vm375, %v432, 0
        %v444 = vsel %vm379, %v352, 0
        %446 = vmatprep.subr.bf16.mxu0 0
        %447 = vmatpush1.bf16.msra.mxu0 %v444
        %448 = vmatprep.subr.bf16.mxu0 0
        %449 = vmatpush1.bf16.msra.mxu0 0
        %450 = vmatprep.subr.bf16.mxu0 0
        %451 = vmatpush1.bf16.msra.mxu0 0
        %452 = vmatprep.subr.bf16.mxu0 0
        %453 = vmatpush1.bf16.msra.mxu0 0
        %454 = vmatprep.subr.bf16.mxu0 0
        %455 = vmatpush1.bf16.msra.mxu0 0
        %456 = vmatprep.subr.bf16.mxu0 0
        %457 = vmatpush1.bf16.msra.mxu0 0
        %458 = vmatprep.subr.bf16.mxu0 0
        %459 = vmatpush1.bf16.msra.mxu0 0
        %460 = vmatprep.subr.bf16.mxu0 0
        %461 = vmatpush1.bf16.msra.mxu0 0
        %462 = vmatprep.subr.bf16.mxu0 0
        %463 = vmatpush1.bf16.msra.mxu0 0
        %464 = vmatprep.subr.bf16.mxu0 0
        %465 = vmatpush1.bf16.msra.mxu0 0
        %466 = vmatprep.subr.bf16.mxu0 0
        %467 = vmatpush1.bf16.msra.mxu0 0
        %468 = vmatprep.subr.bf16.mxu0 0
        %469 = vmatpush1.bf16.msra.mxu0 0
        %470 = vmatprep.subr.bf16.mxu0 0
        %471 = vmatpush1.bf16.msra.mxu0 0
        %472 = vmatprep.subr.bf16.mxu0 0
        %473 = vmatpush1.bf16.msra.mxu0 0
        %474 = vmatprep.subr.bf16.mxu0 0
        %475 = vmatpush1.bf16.msra.mxu0 0
        %476 = vmatprep.subr.bf16.mxu0 0
        %477 = vmatpush1.bf16.msra.mxu0 0
        %478 = vmatprep.mubr.bf16.mxu0 0
        %479 = vmatmul.mubr.bf16.gmra.mrb[0].mxu0 %v441
        %v480 = vpop.f32.mrb[0].mxu0
        %v481 = vadd.f32 0.0, %v480
        %v482 = vpop.f32.mrb[0].mxu0
        %v483 = vpop.f32.mrb[0].mxu0
        %v484 = vadd.f32 0.0, %v483
        %v485 = vpop.f32.mrb[0].mxu0
        %486 = vdwg.mxu0
        %v487 = vld [vmem:[#allocation3] sm:$0x1]
        %v488 = vld [vmem:[#allocation3 + $0x1] sm:$0x1]
        %vm489 = vcmask 130048
        %v490 = vsel %vm489, %v418, -inf
        %v491 = vsel %vm489, %v421, -inf
        %v492 = vmax.f32 %v490, %v491
        %v493 = vrot.slane %v492, 4
        %v494 = vmax.f32 %v492, %v493
        %v495 = vrot.slane %v494, 2
        %v496 = vmax.f32 %v494, %v495
        %v497 = vrot.slane %v496, 1
        %v498 = vmax.f32 %v496, %v497
        %v499 = vsel %vm489, %v481, -inf
        %v500 = vsel %vm489, %v484, -inf
        %v501 = vmax.f32 %v499, %v500
        %v502 = vrot.slane %v501, 4
        %v503 = vmax.f32 %v501, %v502
        %v504 = vrot.slane %v503, 2
        %v505 = vmax.f32 %v503, %v504
        %v506 = vrot.slane %v505, 1
        %v507 = vmax.f32 %v505, %v506
        %v508 = vmax.f32 %v487, %v498
        %v509 = vmax.f32 %v488, %v507
        %v510 = vsub.f32 %v487, %v508
        %v511 = vsub.f32 %v488, %v509
        %v512 = vmul.f32 %v510, 1.442695
        %v513 = vpow.pop %v512
        %v514 = vmul.f32 %v511, 1.442695
        %v515 = vpow.pop %v514
        %v518 = vlaneseq
        %v519 = vshrl.u32 %v518, 7
        %v520 = vsub.s32 0, %v519
        %v521 = vrot.slane %v508, %v520
        %v522 = vlaneseq
        %v523 = vshrl.u32 %v522, 7
        %v524 = vsub.s32 0, %v523
        %v525 = vrot.slane %v509, %v524
        %v528 = vsub.f32 %v418, %v521
        %v529 = vsub.f32 %v421, %v521
        %v530 = vsub.f32 %v481, %v525
        %v531 = vsub.f32 %v484, %v525
        %v532 = vmul.f32 %v528, 1.442695
        %v533 = vpow.pop %v532
        %v534 = vmul.f32 %v529, 1.442695
        %v535 = vpow.pop %v534
        %v536 = vmul.f32 %v530, 1.442695
        %v537 = vpow.pop %v536
        %v538 = vmul.f32 %v531, 1.442695
        %v539 = vpow.pop %v538
        %v540 = vld [vmem:[#allocation4] sm:$0x1]
        %v541 = vld [vmem:[#allocation4 + $0x1] sm:$0x1]
        %v542 = vmul.f32 %v513, %v540
        %v543 = vmul.f32 %v515, %v541
        %v544 = vsel %vm489, %v533, 0.0
        %v545 = vsel %vm489, %v535, 0.0
        %v546 = vadd.f32 %v544, %v545
        %v547 = vrot.slane %v546, 4
        %v548 = vadd.f32 %v546, %v547
        %v549 = vrot.slane %v548, 2
        %v550 = vadd.f32 %v548, %v549
        %v551 = vrot.slane %v550, 1
        %v552 = vadd.f32 %v550, %v551
        %v553 = vsel %vm489, %v537, 0.0
        %v554 = vsel %vm489, %v539, 0.0
        %v555 = vadd.f32 %v553, %v554
        %v556 = vrot.slane %v555, 4
        %v557 = vadd.f32 %v555, %v556
        %v558 = vrot.slane %v557, 2
        %v559 = vadd.f32 %v557, %v558
        %v560 = vrot.slane %v559, 1
        %v561 = vadd.f32 %v559, %v560
        %v562 = vadd.f32 %v542, %v552
        %v563 = vadd.f32 %v543, %v561
        %vm564 = vcmask 122880
        %565 = vst.msk [vmem:[#allocation4] sm:$0x1] %vm564, %v562
        %566 = vst.msk [vmem:[#allocation4 + $0x1] sm:$0x1] %vm564, %v563
        %567 = vst.msk [vmem:[#allocation3] sm:$0x1] %vm564, %v508
        %568 = vst.msk [vmem:[#allocation3 + $0x1] sm:$0x1] %vm564, %v509
        %v569 = vld [vmem:[%s290] sm:$0xff]
        %v570 = vld [vmem:[%s290 + $0x8] sm:$0xff]
        %v571 = vpack.c.bf16 %v569, %v569
        %v572 = vpack.c.bf16 %v570, %v570
        %v573 = vpack.c.bf16 %v535, %v533
        %v574 = vpack.c.bf16 %v539, %v537
        %v576 = vsel %vm489, %v571, 0
        %578 = vmatprep.subr.bf16.mxu0 0
        %579 = vmatpush1.bf16.msra.mxu0 %v573
        %580 = vmatprep.subr.bf16.mxu0 0
        %581 = vmatpush1.bf16.msra.mxu0 0
        %582 = vmatprep.subr.bf16.mxu0 0
        %583 = vmatpush1.bf16.msra.mxu0 0
        %584 = vmatprep.subr.bf16.mxu0 0
        %585 = vmatpush1.bf16.msra.mxu0 0
        %586 = vmatprep.subr.bf16.mxu0 0
        %587 = vmatpush1.bf16.msra.mxu0 0
        %588 = vmatprep.subr.bf16.mxu0 0
        %589 = vmatpush1.bf16.msra.mxu0 0
        %590 = vmatprep.subr.bf16.mxu0 0
        %591 = vmatpush1.bf16.msra.mxu0 0
        %592 = vmatprep.subr.bf16.mxu0 0
        %593 = vmatpush1.bf16.msra.mxu0 0
        %594 = vmatprep.subr.bf16.mxu0 0
        %595 = vmatpush1.bf16.msra.mxu0 0
        %596 = vmatprep.subr.bf16.mxu0 0
        %597 = vmatpush1.bf16.msra.mxu0 0
        %598 = vmatprep.subr.bf16.mxu0 0
        %599 = vmatpush1.bf16.msra.mxu0 0
        %600 = vmatprep.subr.bf16.mxu0 0
        %601 = vmatpush1.bf16.msra.mxu0 0
        %602 = vmatprep.subr.bf16.mxu0 0
        %603 = vmatpush1.bf16.msra.mxu0 0
        %604 = vmatprep.subr.bf16.mxu0 0
        %605 = vmatpush1.bf16.msra.mxu0 0
        %606 = vmatprep.subr.bf16.mxu0 0
        %607 = vmatpush1.bf16.msra.mxu0 0
        %608 = vmatprep.subr.bf16.mxu0 0
        %609 = vmatpush1.bf16.msra.mxu0 0
        %610 = vmatprep.mubr.bf16.mxu0 0
        %611 = vmatmul.mubr.bf16.gmra.mrb[0].mxu0 %v576
        %v612 = vpop.f32.mrb[0].mxu0
        %v613 = vadd.f32 0.0, %v612
        %v614 = vpop.f32.mrb[0].mxu0
        %v615 = vpop.f32.mrb[0].mxu0
        %v616 = vpop.f32.mrb[0].mxu0
        %617 = vdwg.mxu0
        %v619 = vsel %vm489, %v572, 0
        %621 = vmatprep.subr.bf16.mxu0 0
        %622 = vmatpush1.bf16.msra.mxu0 %v574
        %623 = vmatprep.subr.bf16.mxu0 0
        %624 = vmatpush1.bf16.msra.mxu0 0
        %625 = vmatprep.subr.bf16.mxu0 0
        %626 = vmatpush1.bf16.msra.mxu0 0
        %627 = vmatprep.subr.bf16.mxu0 0
        %628 = vmatpush1.bf16.msra.mxu0 0
        %629 = vmatprep.subr.bf16.mxu0 0
        %630 = vmatpush1.bf16.msra.mxu0 0
        %631 = vmatprep.subr.bf16.mxu0 0
        %632 = vmatpush1.bf16.msra.mxu0 0
        %633 = vmatprep.subr.bf16.mxu0 0
        %634 = vmatpush1.bf16.msra.mxu0 0
        %635 = vmatprep.subr.bf16.mxu0 0
        %636 = vmatpush1.bf16.msra.mxu0 0
        %637 = vmatprep.subr.bf16.mxu0 0
        %638 = vmatpush1.bf16.msra.mxu0 0
        %639 = vmatprep.subr.bf16.mxu0 0
        %640 = vmatpush1.bf16.msra.mxu0 0
        %641 = vmatprep.subr.bf16.mxu0 0
        %642 = vmatpush1.bf16.msra.mxu0 0
        %643 = vmatprep.subr.bf16.mxu0 0
        %644 = vmatpush1.bf16.msra.mxu0 0
        %645 = vmatprep.subr.bf16.mxu0 0
        %646 = vmatpush1.bf16.msra.mxu0 0
        %647 = vmatprep.subr.bf16.mxu0 0
        %648 = vmatpush1.bf16.msra.mxu0 0
        %649 = vmatprep.subr.bf16.mxu0 0
        %650 = vmatpush1.bf16.msra.mxu0 0
        %651 = vmatprep.subr.bf16.mxu0 0
        %652 = vmatpush1.bf16.msra.mxu0 0
        %653 = vmatprep.mubr.bf16.mxu0 0
        %654 = vmatmul.mubr.bf16.gmra.mrb[0].mxu0 %v619
        %v655 = vpop.f32.mrb[0].mxu0
        %v656 = vadd.f32 0.0, %v655
        %v657 = vpop.f32.mrb[0].mxu0
        %v658 = vpop.f32.mrb[0].mxu0
        %v659 = vpop.f32.mrb[0].mxu0
        %660 = vdwg.mxu0
        %v661 = vld [vmem:[#allocation5] sm:$0xff]
        %v662 = vld [vmem:[#allocation5 + $0x8] sm:$0xff]
        %v665 = vlaneseq
        %v666 = vshrl.u32 %v665, 7
        %v667 = vsub.s32 0, %v666
        %v668 = vrot.slane %v513, %v667
        %v669 = vlaneseq
        %v670 = vshrl.u32 %v669, 7
        %v671 = vsub.s32 0, %v670
        %v672 = vrot.slane %v515, %v671
        %v675 = vmul.f32 %v668, %v661
        %v676 = vmul.f32 %v672, %v662
        %v677 = vadd.f32 %v675, %v613
        %v678 = vadd.f32 %v676, %v656
        %679 = vst.msk [vmem:[#allocation5] sm:$0xff] %vm489, %v677
        %680 = vst.msk [vmem:[#allocation5 + $0x8] sm:$0xff] %vm489, %v678
        // Predicated region
        $region49: #{tpu_custom_call.1} parent=31 // pred_check
          %p681 = pneg %p330
        $region50: #{tpu_custom_call.1} parent=31 // pred_check_branch
          %683 = sbr.rel (%p681) target = $region52
        $region51: #{tpu_custom_call.1} parent=31 // pred_region
          %v684 = vld [vmem:[#allocation4] sm:$0x1]
          %v685 = vld [vmem:[#allocation4 + $0x1] sm:$0x1]
          %v686 = vrcp.pop %v684
          %v687 = vrcp.pop %v685
          %v688 = vld [vmem:[#allocation5] sm:$0xff]
          %v689 = vld [vmem:[#allocation5 + $0x8] sm:$0xff]
          %v692 = vlaneseq
          %v693 = vshrl.u32 %v692, 7
          %v694 = vsub.s32 0, %v693
          %v695 = vrot.slane %v686, %v694
          %v696 = vlaneseq
          %v697 = vshrl.u32 %v696, 7
          %v698 = vsub.s32 0, %v697
          %v699 = vrot.slane %v687, %v698
          %v702 = vmul.f32 %v688, %v695
          %v703 = vmul.f32 %v689, %v699
          %704 = vst.msk [vmem:[%s322] sm:$0xff] %vm489, %v702
          %705 = vst.msk [vmem:[%s322 + $0x8] sm:$0xff] %vm489, %v703
        $region52: #{tpu_custom_call.1} parent=31 // pred_fallthru
          _
        %s706 = sand.u32 %s155, 1
        %s707 = scalar_lea.sflag [#allocation8], %s706
        %s708 = sand.u32 %s155, 1
        %s709 = smul.addr %s708, 16
        %s710 = scalar_lea.vmem [#allocation12], %s709
        // Predicated region
        $region53: #{tpu_custom_call.1} parent=31 // pred_check
          %p711 = pneg %p165
        $region54: #{tpu_custom_call.1} parent=31 // pred_check_branch
          %713 = sbr.rel (%p711) target = $region56
        $region55: #{tpu_custom_call.1} parent=31 // pred_region
          %s714 = smul.u32 2, %s30
          %s716 = ssub.s32 256, 256
          %717 = vsyncadd %s707, %s716
          %s718 = sadd.s32 %s31, %s714
          %s719 = smul.addr %s29, 2
          %s720 = sadd.s32 %s718, %s719
          %s721 = smul.addr %s720, 128
          %s722 = scalar_lea.hbm %s3, %s721
          %s723 = sshll.u32 %s710, 4
          %s724 = int_to_ptr.vmem [resolvable:$true] %s723
          %729 = dma.vmem_to_hbm [thread:$0]  %s724, 256, %s722, %s707, 128, 128, 8
        $region56: #{tpu_custom_call.1} parent=31 // pred_fallthru
          _
      $region32: #{tpu_custom_call.1} parent=5 // pred_fallthru
        _
      %p730 = scmp.le.s32.totalorder 2, %s18
      // Predicated region
      $region57: #{tpu_custom_call.1} parent=5 // pred_check
        %p731 = pneg %p730
      $region58: #{tpu_custom_call.1} parent=5 // pred_check_branch
        %733 = sbr.rel (%p731) target = $region60
      $region59: #{tpu_custom_call.1} parent=5 // pred_region
        %s734 = ssub.s32 %s18, 2
        // Predicated region
        $region61: #{tpu_custom_call.1} parent=59 // pred_check
          %p735 = pneg %p171
        $region62: #{tpu_custom_call.1} parent=59 // pred_check_branch
          %737 = sbr.rel (%p735) target = $region64
        $region63: #{tpu_custom_call.1} parent=59 // pred_region
          %s738 = sand.u32 %s156, 1
          %s739 = scalar_lea.sflag [#allocation8], %s738
          %s740 = sand.u32 %s156, 1
          %s741 = smul.addr %s740, 16
          %s742 = scalar_lea.vmem [#allocation12], %s741
          %743 = dma.done %s739, 256
        $region64: #{tpu_custom_call.1} parent=59 // pred_fallthru
          _
      $region60: #{tpu_custom_call.1} parent=5 // pred_fallthru
        _
    $region6: #{tpu_custom_call.1} parent=1 // loop_footer
      %s22 = sadd.s32 1, %s18
    $region7: #{tpu_custom_call.1} parent=1 // loop_footer_branch
      %17 = sbr.rel target = $region3
    $region8: #{tpu_custom_call.1} parent=1 // loop_exit
      _
    %744 = vsyncpa [#allocation7], 1
    %s745 = scalar_lea.sflag [#allocation7], 1
    %746 = vsyncpa %s745, 1
    %747 = vsyncpa [#allocation10], 1
    %s748 = scalar_lea.sflag [#allocation10], 1
    %749 = vsyncpa %s748, 1
    %750 = vsyncpa [#allocation8], 1
    %s751 = scalar_lea.sflag [#allocation8], 1
    %752 = vsyncpa %s751, 1

</llo_original>
